<compile_context>
chip_gen: v7x
topology: tpu7x:2x2x1
jax: 0.10.0
libtpu: 0.0.40
codegen_flags: <defaults>
</compile_context>

<pallas_src>
import numpy as np
import jax
import jax.numpy as jnp
from jax import lax
from jax.experimental import pallas as pl
from jax.experimental.pallas import tpu as pltpu


# ----------------------------- Pallas kernel ------------------------------ #

def _refine_head_kernel(x_ref, m_ref, w1_ref, b1_ref, w2_ref, b2_ref,
                        wh_ref, bh_ref, out_ref):
    """One batch element.

    x_ref : (T, Cin) f32 features, m_ref : (T, 1) f32 {0,1} mask.
    w*_ref: tap-folded (3*C, Cout) bf16 weights, b*_ref: (1, Cout) f32 biases.
    out_ref: (T, 2 + 2 + 2*nc) fused [offset | prob-logit | cls-logit] slab.
    """
    x = x_ref[...]                                     # (T, Cin) f32
    m = m_ref[...]                                     # (T, 1)   f32

    T = x.shape[0]
    rows = lax.broadcasted_iota(jnp.int32, (T, 1), 0)
    not_first = (rows > 0).astype(jnp.float32)         # zero row 0 of the +1 roll
    not_last = (rows < T - 1).astype(jnp.float32)      # zero row T-1 of the -1 roll

    def conv_k3(h, w_ref_, b_ref_):
        # conv1d(k=3, stride=1, pad=1) as ONE (T, 3C) @ (3C, Cout) MXU matmul.
        # The +-1 time shifts go to the XLU via pltpu.roll; wrapped rows are
        # zeroed so the edges see the conv's zero padding.
        h_prev = pltpu.roll(h, shift=1, axis=0) * not_first      # h[t-1]
        h_next = pltpu.roll(h, shift=T - 1, axis=0) * not_last   # h[t+1]
        cols = jnp.concatenate([h_prev, h, h_next], axis=-1)     # (T, 3C) f32
        y = jnp.dot(cols.astype(jnp.bfloat16), w_ref_[...],      # bf16 x bf16
                    preferred_element_type=jnp.float32)          # f32 accumulate
        return y + b_ref_[...]

    # two shared head layers: MaskedConv1D -> Identity (with_ln=False) -> ReLU
    h = jnp.maximum(conv_k3(x, w1_ref, b1_ref) * m, 0.0)
    h = jnp.maximum(conv_k3(h, w2_ref, b2_ref) * m, 0.0)

    # fused (offset | prob | cls) masked-conv head; Scale() is pre-folded into
    # the offset columns of wh/bh by the wrapper.
    out_ref[...] = conv_k3(h, wh_ref, bh_ref) * m


# ------------------------------ JAX wrapper ------------------------------- #

def _fold_taps(w_oik):
    """PyTorch Conv1d weight (Cout, Cin, 3) -> MXU-ready (3*Cin, Cout)."""
    cout, cin, k = w_oik.shape
    return jnp.transpose(w_oik, (2, 1, 0)).reshape(k * cin, cout)


def make_refine_head_params(w1, b1, w2, b2, wo, bo, wp, bp, wc, bc):
    """Tap-fold + head-fuse the parameters once (shared by all FPN levels)."""
    return dict(
        w1=_fold_taps(w1).astype(jnp.bfloat16),
        b1=b1.reshape(1, -1).astype(jnp.float32),
        w2=_fold_taps(w2).astype(jnp.bfloat16),
        b2=b2.reshape(1, -1).astype(jnp.float32),
        # heads fused along Cout: [offset(2) | prob(2) | cls(2*num_classes)]
        wh=jnp.concatenate([_fold_taps(wo), _fold_taps(wp), _fold_taps(wc)], axis=1),
        bh=jnp.concatenate([bo, bp, bc]).reshape(1, -1).astype(jnp.float32),
    )


def refine_head_level(x_nct, mask_b1t, params, scale_value):
    """One FPN level.  x_nct: (B, Cin, T) f32, mask_b1t: (B, 1, T) bool.

    Returns (offsets, probs, logits) in PyTorch NCT layout.
    """
    B, Cin, T = x_nct.shape
    # NCT -> channels-last (time on sublanes, channels on lanes).
    x = jnp.transpose(x_nct, (0, 2, 1)).astype(jnp.float32)        # (B, T, Cin)
    m = jnp.transpose(mask_b1t.astype(jnp.float32), (0, 2, 1))     # (B, T, 1)

    w1, b1, w2, b2 = params["w1"], params["b1"], params["w2"], params["b2"]
    wh_f32, bh_f32 = params["wh"], params["bh"]
    Ch = wh_f32.shape[1]                                            # 2 + 2 + 2*nc

    # Fold the per-level Scale() into the offset columns of the fused head.
    col_scale = jnp.concatenate([jnp.full((2,), scale_value, jnp.float32),
                                 jnp.ones((Ch - 2,), jnp.float32)])
    wh = (wh_f32 * col_scale[None, :]).astype(jnp.bfloat16)
    bh = bh_f32 * col_scale[None, :]

    fused = pl.pallas_call(
        _refine_head_kernel,
        out_shape=jax.ShapeDtypeStruct((B, T, Ch), jnp.float32),
        grid=(B,),
        in_specs=[
            pl.BlockSpec((None, T, Cin), lambda b: (b, 0, 0)),   # x (batch-sliced)
            pl.BlockSpec((None, T, 1), lambda b: (b, 0, 0)),     # mask
            pl.BlockSpec(w1.shape, lambda b: (0, 0)),            # layer-1 weight
            pl.BlockSpec(b1.shape, lambda b: (0, 0)),
            pl.BlockSpec(w2.shape, lambda b: (0, 0)),            # layer-2 weight
            pl.BlockSpec(b2.shape, lambda b: (0, 0)),
            pl.BlockSpec(wh.shape, lambda b: (0, 0)),            # fused heads
            pl.BlockSpec(bh.shape, lambda b: (0, 0)),
        ],
        out_specs=pl.BlockSpec((None, T, Ch), lambda b: (b, 0, 0)),
        compiler_params=pltpu.CompilerParams(
            dimension_semantics=("parallel",),          # batch axis -> megacore
            vmem_limit_bytes=32 * 1024 * 1024,
        ),
    )(x, m, w1, b1, w2, b2, wh, bh)

    # Split the lane-dense fused slab; sigmoid on the tiny prob slice here
    # (masked positions give sigmoid(0) = 0.5, matching the reference).
    off = fused[..., 0:2]                    # already scaled & masked
    prob = jax.nn.sigmoid(fused[..., 2:4])
    logit = fused[..., 4:]
    to_nct = lambda a: jnp.transpose(a, (0, 2, 1))   # back to PyTorch (B, C, T)
    return to_nct(off), to_nct(prob), to_nct(logit)


# ------------------------- plain-JAX reference ----------------------------- #

def _ref_masked_conv(x_nct, m_f, w_oik, b):
    y = lax.conv_general_dilated(
        x_nct, w_oik, window_strides=(1,), padding=[(1, 1)],
        dimension_numbers=("NCH", "OIH", "NCH"),
        preferred_element_type=jnp.float32)
    return (y + b[None, :, None]) * m_f


# --------------------------------- main ------------------------------------ #

if __name__ == "__main__":
    B = 2
    input_dim = 32
    feat_dim = 32
    num_classes = 20          # cls head -> 2 * num_classes = 40 channels
    fpn_levels = 2
    Ts = (16, 8)

    key = jax.random.PRNGKey(0)
    keys = jax.random.split(key, 12)

    def conv_params(kw, kb, cout, cin):
        # PyTorch Conv1d weight layout (Cout, Cin, K); deterministic synthetic init.
        w = jax.random.normal(kw, (cout, cin, 3), jnp.float32) * 0.1
        b = jax.random.normal(kb, (cout,), jnp.float32) * 0.1
        return w, b

    w1, b1 = conv_params(keys[0], keys[1], feat_dim, input_dim)
    w2, b2 = conv_params(keys[2], keys[3], feat_dim, feat_dim)
    wo, bo = conv_params(keys[4], keys[5], 2, feat_dim)
    wp, bp = conv_params(keys[6], keys[7], 2, feat_dim)
    wc, bc = conv_params(keys[8], keys[9], 2 * num_classes, feat_dim)
    # Scale() params (module inits to 1.0; perturbed so the multiply is exercised)
    scales = jnp.array([1.0, 0.5], jnp.float32)

    params = make_refine_head_params(w1, b1, w2, b2, wo, bo, wp, bp, wc, bc)

    # synthetic FPN features (B, C, T) and boolean masks (B, 1, T)
    feats, masks = [], []
    lens = [jnp.array([13, 16]), jnp.array([7, 8])]
    for l, T in enumerate(Ts):
        kf = jax.random.fold_in(keys[10], l)
        feats.append(jax.random.normal(kf, (B, input_dim, T), jnp.float32))
        masks.append(jnp.arange(T)[None, None, :] < lens[l][:, None, None])

    # ---- Pallas forward ----
    out_offsets, out_probs, out_logits = [], [], []
    for l in range(fpn_levels):
        o, p, c = refine_head_level(feats[l], masks[l], params, scales[l])
        out_offsets.append(o)
        out_probs.append(p)
        out_logits.append(c)
    jax.block_until_ready((out_offsets, out_probs, out_logits))

    # ---- reference forward (plain JAX f32, PyTorch NCT layout) ----
    # Tolerances account for bf16 matmul inputs in the kernel (f32 accumulate).
    for l in range(fpn_levels):
        mf = masks[l].astype(jnp.float32)
        h = jnp.maximum(_ref_masked_conv(feats[l], mf, w1, b1), 0.0)
        h = jnp.maximum(_ref_masked_conv(h, mf, w2, b2), 0.0)
        ref_off = _ref_masked_conv(h, mf, wo, bo) * scales[l]
        ref_prob = jax.nn.sigmoid(_ref_masked_conv(h, mf, wp, bp))
        ref_logit = _ref_masked_conv(h, mf, wc, bc)
        np.testing.assert_allclose(np.asarray(out_offsets[l]), np.asarray(ref_off),
                                   rtol=5e-2, atol=5e-2)
        np.testing.assert_allclose(np.asarray(out_probs[l]), np.asarray(ref_prob),
                                   rtol=5e-2, atol=5e-2)
        np.testing.assert_allclose(np.asarray(out_logits[l]), np.asarray(ref_logit),
                                   rtol=5e-2, atol=5e-2)

    print("KERNEL_OK")
</pallas_src>

<mosaic_0001>
module attributes {stable_mosaic.version = 11 : i64} {
  func.func @_refine_head_kernel(%arg0: i32, %arg1: memref<1x16x32xf32, #tpu.memory_space<vmem>>, %arg2: memref<1x16x1xf32, #tpu.memory_space<vmem>>, %arg3: memref<96x32xbf16, #tpu.memory_space<vmem>>, %arg4: memref<1x32xf32, #tpu.memory_space<vmem>>, %arg5: memref<96x32xbf16, #tpu.memory_space<vmem>>, %arg6: memref<1x32xf32, #tpu.memory_space<vmem>>, %arg7: memref<96x44xbf16, #tpu.memory_space<vmem>>, %arg8: memref<1x44xf32, #tpu.memory_space<vmem>>, %arg9: memref<1x16x44xf32, #tpu.memory_space<vmem>>) attributes {dimension_semantics = [#tpu.dimension_semantics<parallel>], iteration_bounds = array<i64: 2>, scalar_prefetch = 0 : i64, scratch_operands = 0 : i64, tpu.core_type = #tpu.core_type<tc>, window_params = [{transform_indices = @transform_0, window_bounds = array<i64: 1, 16, 32>}, {transform_indices = @transform_1, window_bounds = array<i64: 1, 16, 1>}, {pipeline_mode = #tpu.pipeline_mode<synchronous>, transform_indices = @transform_2, window_bounds = array<i64: 96, 32>}, {pipeline_mode = #tpu.pipeline_mode<synchronous>, transform_indices = @transform_3, window_bounds = array<i64: 1, 32>}, {pipeline_mode = #tpu.pipeline_mode<synchronous>, transform_indices = @transform_4, window_bounds = array<i64: 96, 32>}, {pipeline_mode = #tpu.pipeline_mode<synchronous>, transform_indices = @transform_5, window_bounds = array<i64: 1, 32>}, {pipeline_mode = #tpu.pipeline_mode<synchronous>, transform_indices = @transform_6, window_bounds = array<i64: 96, 44>}, {pipeline_mode = #tpu.pipeline_mode<synchronous>, transform_indices = @transform_7, window_bounds = array<i64: 1, 44>}, {transform_indices = @transform_8, window_bounds = array<i64: 1, 16, 44>}]} {
    %c0 = arith.constant 0 : index
    %c0_0 = arith.constant 0 : index
    %c0_1 = arith.constant 0 : index
    %0 = vector.load %arg1[%c0, %c0_0, %c0_1] : memref<1x16x32xf32, #tpu.memory_space<vmem>>, vector<1x16x32xf32>
    %1 = vector.shape_cast %0 : vector<1x16x32xf32> to vector<16x32xf32>
    %c0_2 = arith.constant 0 : index
    %c0_3 = arith.constant 0 : index
    %c0_4 = arith.constant 0 : index
    %2 = vector.load %arg2[%c0_2, %c0_3, %c0_4] : memref<1x16x1xf32, #tpu.memory_space<vmem>>, vector<1x16x1xf32>
    %3 = vector.shape_cast %2 : vector<1x16x1xf32> to vector<16x1xf32>
    %4 = tpu.iota {dimensions = array<i32: 0>} : vector<16x1xi32>
    %c0_i32 = arith.constant 0 : i32
    %5 = vector.broadcast %c0_i32 : i32 to vector<16x1xi32>
    %6 = arith.cmpi sgt, %4, %5 : vector<16x1xi32>
    %7 = arith.extui %6 : vector<16x1xi1> to vector<16x1xi32>
    %8 = arith.sitofp %7 : vector<16x1xi32> to vector<16x1xf32>
    %c15_i32 = arith.constant 15 : i32
    %9 = vector.broadcast %c15_i32 : i32 to vector<16x1xi32>
    %10 = arith.cmpi slt, %4, %9 : vector<16x1xi32>
    %11 = arith.extui %10 : vector<16x1xi1> to vector<16x1xi32>
    %12 = arith.sitofp %11 : vector<16x1xi32> to vector<16x1xf32>
    %c1_i32 = arith.constant 1 : i32
    %13 = tpu.dynamic_rotate %1 by %c1_i32 dim 0 : vector<16x32xf32>, i32 -> vector<16x32xf32>
    %14 = vector.broadcast %8 : vector<16x1xf32> to vector<16x32xf32>
    %15 = arith.mulf %13, %14 : vector<16x32xf32>
    %c15_i32_5 = arith.constant 15 : i32
    %16 = tpu.dynamic_rotate %1 by %c15_i32_5 dim 0 : vector<16x32xf32>, i32 -> vector<16x32xf32>
    %17 = vector.broadcast %12 : vector<16x1xf32> to vector<16x32xf32>
    %18 = arith.mulf %16, %17 : vector<16x32xf32>
    %19 = tpu.concatenate %15, %1, %18 in 1 : vector<16x32xf32>, vector<16x32xf32>, vector<16x32xf32> -> vector<16x96xf32>
    %20 = arith.truncf %19 : vector<16x96xf32> to vector<16x96xbf16>
    %c0_6 = arith.constant 0 : index
    %c0_7 = arith.constant 0 : index
    %21 = vector.load %arg3[%c0_6, %c0_7] : memref<96x32xbf16, #tpu.memory_space<vmem>>, vector<96x32xbf16>
    %cst = arith.constant dense<0.000000e+00> : vector<16x32xf32>
    %22 = tpu.matmul %20, %21, %cst {dimension_numbers = #tpu.dot_dimension_numbers<[1], [0], [0], [1], [0, 0, 1, 1], [], []>} : vector<16x96xbf16>, vector<96x32xbf16>, vector<16x32xf32> -> vector<16x32xf32>
    %c0_8 = arith.constant 0 : index
    %c0_9 = arith.constant 0 : index
    %23 = vector.load %arg4[%c0_8, %c0_9] : memref<1x32xf32, #tpu.memory_space<vmem>>, vector<1x32xf32>
    %24 = vector.broadcast %23 : vector<1x32xf32> to vector<16x32xf32>
    %25 = arith.addf %22, %24 : vector<16x32xf32>
    %26 = vector.broadcast %3 : vector<16x1xf32> to vector<16x32xf32>
    %27 = arith.mulf %25, %26 : vector<16x32xf32>
    %cst_10 = arith.constant 0.000000e+00 : f32
    %28 = vector.broadcast %cst_10 : f32 to vector<16x32xf32>
    %29 = arith.maximumf %27, %28 : vector<16x32xf32>
    %c1_i32_11 = arith.constant 1 : i32
    %30 = tpu.dynamic_rotate %29 by %c1_i32_11 dim 0 : vector<16x32xf32>, i32 -> vector<16x32xf32>
    %31 = vector.broadcast %8 : vector<16x1xf32> to vector<16x32xf32>
    %32 = arith.mulf %30, %31 : vector<16x32xf32>
    %c15_i32_12 = arith.constant 15 : i32
    %33 = tpu.dynamic_rotate %29 by %c15_i32_12 dim 0 : vector<16x32xf32>, i32 -> vector<16x32xf32>
    %34 = vector.broadcast %12 : vector<16x1xf32> to vector<16x32xf32>
    %35 = arith.mulf %33, %34 : vector<16x32xf32>
    %36 = tpu.concatenate %32, %29, %35 in 1 : vector<16x32xf32>, vector<16x32xf32>, vector<16x32xf32> -> vector<16x96xf32>
    %37 = arith.truncf %36 : vector<16x96xf32> to vector<16x96xbf16>
    %c0_13 = arith.constant 0 : index
    %c0_14 = arith.constant 0 : index
    %38 = vector.load %arg5[%c0_13, %c0_14] : memref<96x32xbf16, #tpu.memory_space<vmem>>, vector<96x32xbf16>
    %cst_15 = arith.constant dense<0.000000e+00> : vector<16x32xf32>
    %39 = tpu.matmul %37, %38, %cst_15 {dimension_numbers = #tpu.dot_dimension_numbers<[1], [0], [0], [1], [0, 0, 1, 1], [], []>} : vector<16x96xbf16>, vector<96x32xbf16>, vector<16x32xf32> -> vector<16x32xf32>
    %c0_16 = arith.constant 0 : index
    %c0_17 = arith.constant 0 : index
    %40 = vector.load %arg6[%c0_16, %c0_17] : memref<1x32xf32, #tpu.memory_space<vmem>>, vector<1x32xf32>
    %41 = vector.broadcast %40 : vector<1x32xf32> to vector<16x32xf32>
    %42 = arith.addf %39, %41 : vector<16x32xf32>
    %43 = vector.broadcast %3 : vector<16x1xf32> to vector<16x32xf32>
    %44 = arith.mulf %42, %43 : vector<16x32xf32>
    %cst_18 = arith.constant 0.000000e+00 : f32
    %45 = vector.broadcast %cst_18 : f32 to vector<16x32xf32>
    %46 = arith.maximumf %44, %45 : vector<16x32xf32>
    %c1_i32_19 = arith.constant 1 : i32
    %47 = tpu.dynamic_rotate %46 by %c1_i32_19 dim 0 : vector<16x32xf32>, i32 -> vector<16x32xf32>
    %48 = vector.broadcast %8 : vector<16x1xf32> to vector<16x32xf32>
    %49 = arith.mulf %47, %48 : vector<16x32xf32>
    %c15_i32_20 = arith.constant 15 : i32
    %50 = tpu.dynamic_rotate %46 by %c15_i32_20 dim 0 : vector<16x32xf32>, i32 -> vector<16x32xf32>
    %51 = vector.broadcast %12 : vector<16x1xf32> to vector<16x32xf32>
    %52 = arith.mulf %50, %51 : vector<16x32xf32>
    %53 = tpu.concatenate %49, %46, %52 in 1 : vector<16x32xf32>, vector<16x32xf32>, vector<16x32xf32> -> vector<16x96xf32>
    %54 = arith.truncf %53 : vector<16x96xf32> to vector<16x96xbf16>
    %c0_21 = arith.constant 0 : index
    %c0_22 = arith.constant 0 : index
    %55 = vector.load %arg7[%c0_21, %c0_22] : memref<96x44xbf16, #tpu.memory_space<vmem>>, vector<96x44xbf16>
    %cst_23 = arith.constant dense<0.000000e+00> : vector<16x44xf32>
    %56 = tpu.matmul %54, %55, %cst_23 {dimension_numbers = #tpu.dot_dimension_numbers<[1], [0], [0], [1], [0, 0, 1, 1], [], []>} : vector<16x96xbf16>, vector<96x44xbf16>, vector<16x44xf32> -> vector<16x44xf32>
    %c0_24 = arith.constant 0 : index
    %c0_25 = arith.constant 0 : index
    %57 = vector.load %arg8[%c0_24, %c0_25] : memref<1x44xf32, #tpu.memory_space<vmem>>, vector<1x44xf32>
    %58 = vector.broadcast %57 : vector<1x44xf32> to vector<16x44xf32>
    %59 = arith.addf %56, %58 : vector<16x44xf32>
    %60 = vector.broadcast %3 : vector<16x1xf32> to vector<16x44xf32>
    %61 = arith.mulf %59, %60 : vector<16x44xf32>
    %c0_26 = arith.constant 0 : index
    %c0_27 = arith.constant 0 : index
    %c0_28 = arith.constant 0 : index
    %62 = vector.load %arg9[%c0_26, %c0_27, %c0_28] : memref<1x16x44xf32, #tpu.memory_space<vmem>>, vector<1x16x44xf32>
    %63 = vector.shape_cast %62 : vector<1x16x44xf32> to vector<16x44xf32>
    %64 = vector.shape_cast %61 : vector<16x44xf32> to vector<1x16x44xf32>
    tpu.vector_store %arg9[%c0_26, %c0_27, %c0_28], %64 {strides = array<i32>} : memref<1x16x44xf32, #tpu.memory_space<vmem>>, vector<1x16x44xf32>,
    return
  }
  func.func @transform_0(%arg0: i32) -> (i32, i32, i32) {
    %c0_i32 = arith.constant 0 : i32
    %c0_i32_0 = arith.constant 0 : i32
    %c0_i32_1 = arith.constant 0 : i32
    return %arg0, %c0_i32, %c0_i32_0 : i32, i32, i32
  }
  func.func @transform_1(%arg0: i32) -> (i32, i32, i32) {
    %c0_i32 = arith.constant 0 : i32
    %c0_i32_0 = arith.constant 0 : i32
    %c0_i32_1 = arith.constant 0 : i32
    return %arg0, %c0_i32, %c0_i32_0 : i32, i32, i32
  }
  func.func @transform_2(%arg0: i32) -> (i32, i32) {
    %c0_i32 = arith.constant 0 : i32
    %c0_i32_0 = arith.constant 0 : i32
    %c0_i32_1 = arith.constant 0 : i32
    return %c0_i32, %c0_i32_0 : i32, i32
  }
  func.func @transform_3(%arg0: i32) -> (i32, i32) {
    %c0_i32 = arith.constant 0 : i32
    %c0_i32_0 = arith.constant 0 : i32
    %c0_i32_1 = arith.constant 0 : i32
    return %c0_i32, %c0_i32_0 : i32, i32
  }
  func.func @transform_4(%arg0: i32) -> (i32, i32) {
    %c0_i32 = arith.constant 0 : i32
    %c0_i32_0 = arith.constant 0 : i32
    %c0_i32_1 = arith.constant 0 : i32
    return %c0_i32, %c0_i32_0 : i32, i32
  }
  func.func @transform_5(%arg0: i32) -> (i32, i32) {
    %c0_i32 = arith.constant 0 : i32
    %c0_i32_0 = arith.constant 0 : i32
    %c0_i32_1 = arith.constant 0 : i32
    return %c0_i32, %c0_i32_0 : i32, i32
  }
  func.func @transform_6(%arg0: i32) -> (i32, i32) {
    %c0_i32 = arith.constant 0 : i32
    %c0_i32_0 = arith.constant 0 : i32
    %c0_i32_1 = arith.constant 0 : i32
    return %c0_i32, %c0_i32_0 : i32, i32
  }
  func.func @transform_7(%arg0: i32) -> (i32, i32) {
    %c0_i32 = arith.constant 0 : i32
    %c0_i32_0 = arith.constant 0 : i32
    %c0_i32_1 = arith.constant 0 : i32
    return %c0_i32, %c0_i32_0 : i32, i32
  }
  func.func @transform_8(%arg0: i32) -> (i32, i32, i32) {
    %c0_i32 = arith.constant 0 : i32
    %c0_i32_0 = arith.constant 0 : i32
    %c0_i32_1 = arith.constant 0 : i32
    return %arg0, %c0_i32, %c0_i32_0 : i32, i32, i32
  }
}

</mosaic_0001>

<llo_original>
// kernel: tpu_custom_call.1
$region0: #{tpu_custom_call.1}
  #allocation0 [shape = 'u32[]', space=smem, size = 0x4, offset = 0x4, fixed_abs, tag = 'smem constant byte address 0x4 - core index']
  #allocation1 [shape = 'u32[144,128]{1,0:T(1,128)}', space=vmem, size = 0x12000, scoped, tag = 'internal scratch']
  %s0 = inlined_call_operand.vmem [shape: f32[2,16,32], index: 0, kind: input, shape index: {}]
  %s1 = inlined_call_operand.vmem [shape: f32[2,16,1], index: 1, kind: input, shape index: {}]
  %s2 = inlined_call_operand.vmem [shape: bf16[96,32], index: 2, kind: input, shape index: {}]
  %s3 = inlined_call_operand.vmem [shape: f32[1,32], index: 3, kind: input, shape index: {}]
  %s4 = inlined_call_operand.vmem [shape: bf16[96,32], index: 4, kind: input, shape index: {}]
  %s5 = inlined_call_operand.vmem [shape: f32[1,32], index: 5, kind: input, shape index: {}]
  %s6 = inlined_call_operand.vmem [shape: bf16[96,44], index: 6, kind: input, shape index: {}]
  %s7 = inlined_call_operand.vmem [shape: f32[1,44], index: 7, kind: input, shape index: {}]
  %s8 = inlined_call_operand.hbm [shape: f32[2,16,44], index: 8, kind: output, shape index: {}]
  %s9 = sld [smem:[#allocation0]]
  $region65: #{tpu_custom_call.1} parent=0
    _
  %s11 = ssub.s32 1, %s9
  %s12 = scalar_select 0, %s11, %s9
  $region1: #{tpu_custom_call.1} parent=0
    #allocation2 [shape = 'u8[16384]{0}', space=vmem, size = 0x4000, scoped, tag = 'output window, operand 0']
    #allocation3 [shape = 's32[2]{0}', space=sflag, size = 0x8, scoped, tag = 'scoped memory for tpu_custom_call.1']
    %13 = vsyncpa [#allocation3], 0
    %s14 = scalar_lea.sflag [#allocation3], 1
    %15 = vsyncpa %s14, 0
    loop: start=0, step=1, limit=4
    $region2: #{tpu_custom_call.1} parent=1 // loop_pre_header
      _
    $region3: #{tpu_custom_call.1} parent=1 // loop_header
      %s17 = sphi 0, %s21
      %p18 = scmp.ge.s32.totalorder %s17, 4
      %s27 = sphi 0, %s29
      %s30 = sphi 0, %s27
      %s31 = sphi 0, %s30
      %s47 = sphi 0, %s31
      %s53 = sphi 0, %s55
      %s56 = sphi 0, %s53
      %s57 = sphi 0, %s56
      %s73 = sphi 0, %s57
      %s77 = sphi 0, %s77
      %s79 = sphi 0, %s77
      %s80 = sphi 0, %s79
      %s94 = sphi 0, %s80
      %s98 = sphi 0, %s98
      %s100 = sphi 0, %s98
      %s101 = sphi 0, %s100
      %s115 = sphi 0, %s101
      %s119 = sphi 0, %s119
      %s121 = sphi 0, %s119
      %s122 = sphi 0, %s121
      %s136 = sphi 0, %s122
      %s140 = sphi 0, %s140
      %s142 = sphi 0, %s140
      %s143 = sphi 0, %s142
      %s157 = sphi 0, %s143
      %s161 = sphi 0, %s161
      %s163 = sphi 0, %s161
      %s164 = sphi 0, %s163
      %s178 = sphi 0, %s164
      %s182 = sphi 0, %s182
      %s184 = sphi 0, %s182
      %s185 = sphi 0, %s184
      %s199 = sphi 0, %s185
      %s205 = sphi 0, %s207
      %s208 = sphi 0, %s205
      %s209 = sphi 0, %s208
      %s225 = sphi 0, %s209
    $region4: #{tpu_custom_call.1} parent=1 // loop_header_branch
      %20 = sbr.rel (%p18) target = $region8
    $region5: #{tpu_custom_call.1} parent=1 // loop_body
      %s22 = ssub.s32 %s17, 1
      %s23 = ssub.s32 %s17, 2
      %s24 = sadd.s32 %s17, 1
      %s25 = ssub.s32 %s17, %s24
      %p26 = scmp.eq.s32.totalorder %s25, 0
      %s28 = sadd.s32 %s27, 1
      %s29 = scalar_select %p26, %s27, %s28
      %p32 = pneg %p26
      %p33 = scmp.eq.s32.totalorder %s17, 1
      %p34 = por %p32, %p33
      %p35 = scmp.ne.s32.totalorder %s27, %s30
      %p36 = scmp.eq.s32.totalorder %s17, 0
      %p37 = por %p35, %p36
      %p38 = scmp.ne.s32.totalorder %s27, %s30
      %p39 = scmp.eq.s32.totalorder %s22, 1
      %p40 = por %p38, %p39
      %p41 = scmp.ne.s32.totalorder %s30, %s31
      %p42 = scmp.eq.s32.totalorder %s22, 0
      %p43 = por %p41, %p42
      %p44 = scmp.ne.s32.totalorder %s30, %s31
      %p45 = scmp.eq.s32.totalorder %s23, 1
      %p46 = por %p44, %p45
      %p48 = scmp.ne.s32.totalorder %s31, %s47
      %p49 = scmp.eq.s32.totalorder %s23, 0
      %p50 = por %p48, %p49
      %s51 = ssub.s32 %s17, %s24
      %p52 = scmp.eq.s32.totalorder %s51, 0
      %s54 = sadd.s32 %s53, 1
      %s55 = scalar_select %p52, %s53, %s54
      %p58 = pneg %p52
      %p59 = scmp.eq.s32.totalorder %s17, 1
      %p60 = por %p58, %p59
      %p61 = scmp.ne.s32.totalorder %s53, %s56
      %p62 = scmp.eq.s32.totalorder %s17, 0
      %p63 = por %p61, %p62
      %p64 = scmp.ne.s32.totalorder %s53, %s56
      %p65 = scmp.eq.s32.totalorder %s22, 1
      %p66 = por %p64, %p65
      %p67 = scmp.ne.s32.totalorder %s56, %s57
      %p68 = scmp.eq.s32.totalorder %s22, 0
      %p69 = por %p67, %p68
      %p70 = scmp.ne.s32.totalorder %s56, %s57
      %p71 = scmp.eq.s32.totalorder %s23, 1
      %p72 = por %p70, %p71
      %p74 = scmp.ne.s32.totalorder %s57, %s73
      %p75 = scmp.eq.s32.totalorder %s23, 0
      %p76 = por %p74, %p75
      %s78 = sadd.s32 %s77, 1
      %p81 = scmp.eq.s32.totalorder %s17, 1
      %p82 = scmp.ne.s32.totalorder %s77, %s79
      %p83 = scmp.eq.s32.totalorder %s17, 0
      %p84 = por %p82, %p83
      %p85 = scmp.ne.s32.totalorder %s77, %s79
      %p86 = scmp.eq.s32.totalorder %s22, 1
      %p87 = por %p85, %p86
      %p88 = scmp.ne.s32.totalorder %s79, %s80
      %p89 = scmp.eq.s32.totalorder %s22, 0
      %p90 = por %p88, %p89
      %p91 = scmp.ne.s32.totalorder %s79, %s80
      %p92 = scmp.eq.s32.totalorder %s23, 1
      %p93 = por %p91, %p92
      %p95 = scmp.ne.s32.totalorder %s80, %s94
      %p96 = scmp.eq.s32.totalorder %s23, 0
      %p97 = por %p95, %p96
      %s99 = sadd.s32 %s98, 1
      %p102 = scmp.eq.s32.totalorder %s17, 1
      %p103 = scmp.ne.s32.totalorder %s98, %s100
      %p104 = scmp.eq.s32.totalorder %s17, 0
      %p105 = por %p103, %p104
      %p106 = scmp.ne.s32.totalorder %s98, %s100
      %p107 = scmp.eq.s32.totalorder %s22, 1
      %p108 = por %p106, %p107
      %p109 = scmp.ne.s32.totalorder %s100, %s101
      %p110 = scmp.eq.s32.totalorder %s22, 0
      %p111 = por %p109, %p110
      %p112 = scmp.ne.s32.totalorder %s100, %s101
      %p113 = scmp.eq.s32.totalorder %s23, 1
      %p114 = por %p112, %p113
      %p116 = scmp.ne.s32.totalorder %s101, %s115
      %p117 = scmp.eq.s32.totalorder %s23, 0
      %p118 = por %p116, %p117
      %s120 = sadd.s32 %s119, 1
      %p123 = scmp.eq.s32.totalorder %s17, 1
      %p124 = scmp.ne.s32.totalorder %s119, %s121
      %p125 = scmp.eq.s32.totalorder %s17, 0
      %p126 = por %p124, %p125
      %p127 = scmp.ne.s32.totalorder %s119, %s121
      %p128 = scmp.eq.s32.totalorder %s22, 1
      %p129 = por %p127, %p128
      %p130 = scmp.ne.s32.totalorder %s121, %s122
      %p131 = scmp.eq.s32.totalorder %s22, 0
      %p132 = por %p130, %p131
      %p133 = scmp.ne.s32.totalorder %s121, %s122
      %p134 = scmp.eq.s32.totalorder %s23, 1
      %p135 = por %p133, %p134
      %p137 = scmp.ne.s32.totalorder %s122, %s136
      %p138 = scmp.eq.s32.totalorder %s23, 0
      %p139 = por %p137, %p138
      %s141 = sadd.s32 %s140, 1
      %p144 = scmp.eq.s32.totalorder %s17, 1
      %p145 = scmp.ne.s32.totalorder %s140, %s142
      %p146 = scmp.eq.s32.totalorder %s17, 0
      %p147 = por %p145, %p146
      %p148 = scmp.ne.s32.totalorder %s140, %s142
      %p149 = scmp.eq.s32.totalorder %s22, 1
      %p150 = por %p148, %p149
      %p151 = scmp.ne.s32.totalorder %s142, %s143
      %p152 = scmp.eq.s32.totalorder %s22, 0
      %p153 = por %p151, %p152
      %p154 = scmp.ne.s32.totalorder %s142, %s143
      %p155 = scmp.eq.s32.totalorder %s23, 1
      %p156 = por %p154, %p155
      %p158 = scmp.ne.s32.totalorder %s143, %s157
      %p159 = scmp.eq.s32.totalorder %s23, 0
      %p160 = por %p158, %p159
      %s162 = sadd.s32 %s161, 1
      %p165 = scmp.eq.s32.totalorder %s17, 1
      %p166 = scmp.ne.s32.totalorder %s161, %s163
      %p167 = scmp.eq.s32.totalorder %s17, 0
      %p168 = por %p166, %p167
      %p169 = scmp.ne.s32.totalorder %s161, %s163
      %p170 = scmp.eq.s32.totalorder %s22, 1
      %p171 = por %p169, %p170
      %p172 = scmp.ne.s32.totalorder %s163, %s164
      %p173 = scmp.eq.s32.totalorder %s22, 0
      %p174 = por %p172, %p173
      %p175 = scmp.ne.s32.totalorder %s163, %s164
      %p176 = scmp.eq.s32.totalorder %s23, 1
      %p177 = por %p175, %p176
      %p179 = scmp.ne.s32.totalorder %s164, %s178
      %p180 = scmp.eq.s32.totalorder %s23, 0
      %p181 = por %p179, %p180
      %s183 = sadd.s32 %s182, 1
      %p186 = scmp.eq.s32.totalorder %s17, 1
      %p187 = scmp.ne.s32.totalorder %s182, %s184
      %p188 = scmp.eq.s32.totalorder %s17, 0
      %p189 = por %p187, %p188
      %p190 = scmp.ne.s32.totalorder %s182, %s184
      %p191 = scmp.eq.s32.totalorder %s22, 1
      %p192 = por %p190, %p191
      %p193 = scmp.ne.s32.totalorder %s184, %s185
      %p194 = scmp.eq.s32.totalorder %s22, 0
      %p195 = por %p193, %p194
      %p196 = scmp.ne.s32.totalorder %s184, %s185
      %p197 = scmp.eq.s32.totalorder %s23, 1
      %p198 = por %p196, %p197
      %p200 = scmp.ne.s32.totalorder %s185, %s199
      %p201 = scmp.eq.s32.totalorder %s23, 0
      %p202 = por %p200, %p201
      %s203 = ssub.s32 %s17, %s24
      %p204 = scmp.eq.s32.totalorder %s203, 0
      %s206 = sadd.s32 %s205, 1
      %s207 = scalar_select %p204, %s205, %s206
      %p210 = pneg %p204
      %p211 = scmp.eq.s32.totalorder %s17, 1
      %p212 = por %p210, %p211
      %p213 = scmp.ne.s32.totalorder %s205, %s208
      %p214 = scmp.eq.s32.totalorder %s17, 0
      %p215 = por %p213, %p214
      %p216 = scmp.ne.s32.totalorder %s205, %s208
      %p217 = scmp.eq.s32.totalorder %s22, 1
      %p218 = por %p216, %p217
      %p219 = scmp.ne.s32.totalorder %s208, %s209
      %p220 = scmp.eq.s32.totalorder %s22, 0
      %p221 = por %p219, %p220
      %p222 = scmp.ne.s32.totalorder %s208, %s209
      %p223 = scmp.eq.s32.totalorder %s23, 1
      %p224 = por %p222, %p223
      %p226 = scmp.ne.s32.totalorder %s209, %s225
      %p227 = scmp.eq.s32.totalorder %s23, 0
      %p228 = por %p226, %p227
      %p229 = scmp.le.s32.totalorder 1, %s17
      %p230 = scmp.lt.s32.totalorder %s17, 3
      %p231 = pnand %p229, %p230
      %p232 = pneg %p231
      // Predicated region
      $region9: #{tpu_custom_call.1} parent=5 // pred_check
        _
      $region10: #{tpu_custom_call.1} parent=5 // pred_check_branch
        %234 = sbr.rel (%p231) target = $region12
      $region11: #{tpu_custom_call.1} parent=5 // pred_region
        %s235 = ssub.s32 %s17, 1
        // Predicated region
        $region13: #{tpu_custom_call.1} parent=11 // pred_check
          %p236 = pneg %p90
        $region14: #{tpu_custom_call.1} parent=11 // pred_check_branch
          %238 = sbr.rel (%p236) target = $region16
        $region15: #{tpu_custom_call.1} parent=11 // pred_region
          _
        $region16: #{tpu_custom_call.1} parent=11 // pred_fallthru
          _
        // Predicated region
        $region17: #{tpu_custom_call.1} parent=11 // pred_check
          %p239 = pneg %p111
        $region18: #{tpu_custom_call.1} parent=11 // pred_check_branch
          %241 = sbr.rel (%p239) target = $region20
        $region19: #{tpu_custom_call.1} parent=11 // pred_region
          _
        $region20: #{tpu_custom_call.1} parent=11 // pred_fallthru
          _
        // Predicated region
        $region21: #{tpu_custom_call.1} parent=11 // pred_check
          %p242 = pneg %p132
        $region22: #{tpu_custom_call.1} parent=11 // pred_check_branch
          %244 = sbr.rel (%p242) target = $region24
        $region23: #{tpu_custom_call.1} parent=11 // pred_region
          _
        $region24: #{tpu_custom_call.1} parent=11 // pred_fallthru
          _
        // Predicated region
        $region25: #{tpu_custom_call.1} parent=11 // pred_check
          %p245 = pneg %p153
        $region26: #{tpu_custom_call.1} parent=11 // pred_check_branch
          %247 = sbr.rel (%p245) target = $region28
        $region27: #{tpu_custom_call.1} parent=11 // pred_region
          _
        $region28: #{tpu_custom_call.1} parent=11 // pred_fallthru
          _
        // Predicated region
        $region29: #{tpu_custom_call.1} parent=11 // pred_check
          %p248 = pneg %p174
        $region30: #{tpu_custom_call.1} parent=11 // pred_check_branch
          %250 = sbr.rel (%p248) target = $region32
        $region31: #{tpu_custom_call.1} parent=11 // pred_region
          _
        $region32: #{tpu_custom_call.1} parent=11 // pred_fallthru
          _
        // Predicated region
        $region33: #{tpu_custom_call.1} parent=11 // pred_check
          %p251 = pneg %p195
        $region34: #{tpu_custom_call.1} parent=11 // pred_check_branch
          %253 = sbr.rel (%p251) target = $region36
        $region35: #{tpu_custom_call.1} parent=11 // pred_region
          _
        $region36: #{tpu_custom_call.1} parent=11 // pred_fallthru
          _
      $region12: #{tpu_custom_call.1} parent=5 // pred_fallthru
        _
      %p254 = scmp.lt.s32.totalorder %s17, 2
      // Predicated region
      $region37: #{tpu_custom_call.1} parent=5 // pred_check
        %p255 = pneg %p254
      $region38: #{tpu_custom_call.1} parent=5 // pred_check_branch
        %257 = sbr.rel (%p255) target = $region40
      $region39: #{tpu_custom_call.1} parent=5 // pred_region
        // Predicated region
        $region41: #{tpu_custom_call.1} parent=39 // pred_check
          %p258 = pneg %p37
        $region42: #{tpu_custom_call.1} parent=39 // pred_check_branch
          %260 = sbr.rel (%p258) target = $region44
        $region43: #{tpu_custom_call.1} parent=39 // pred_region
          %p261 = scmp.lt.s32.totalorder %s17, 1
          %s262 = scalar_select %p261, %s17, 1
          %s263 = smul.addr %s262, 2
          %s264 = smul.addr %s263, 8
          %s265 = scalar_lea.vmem %s0, %s264
        $region44: #{tpu_custom_call.1} parent=39 // pred_fallthru
          _
        // Predicated region
        $region45: #{tpu_custom_call.1} parent=39 // pred_check
          %p266 = pneg %p63
        $region46: #{tpu_custom_call.1} parent=39 // pred_check_branch
          %268 = sbr.rel (%p266) target = $region48
        $region47: #{tpu_custom_call.1} parent=39 // pred_region
          %p269 = scmp.lt.s32.totalorder %s17, 1
          %s270 = scalar_select %p269, %s17, 1
          %s271 = smul.addr %s270, 2
          %s272 = smul.addr %s271, 8
          %s273 = scalar_lea.vmem %s1, %s272
        $region48: #{tpu_custom_call.1} parent=39 // pred_fallthru
          _
      $region40: #{tpu_custom_call.1} parent=5 // pred_fallthru
        _
      %p274 = scmp.le.s32.totalorder 1, %s17
      %p275 = scmp.lt.s32.totalorder %s17, 3
      %p276 = pnand %p274, %p275
      %p277 = pneg %p276
      // Predicated region
      $region49: #{tpu_custom_call.1} parent=5 // pred_check
        _
      $region50: #{tpu_custom_call.1} parent=5 // pred_check_branch
        %279 = sbr.rel (%p276) target = $region52
      $region51: #{tpu_custom_call.1} parent=5 // pred_region
        %s280 = ssub.s32 %s17, 1
        %p281 = scmp.lt.s32.totalorder %s22, 1
        %s282 = scalar_select %p281, %s22, 1
        %s283 = smul.addr %s282, 2
        %s284 = smul.addr %s283, 8
        %s285 = scalar_lea.vmem %s0, %s284
        %p286 = pneg %p43
        %p287 = pneg %p40
        %p288 = scmp.lt.s32.totalorder %s22, 1
        %s289 = scalar_select %p288, %s22, 1
        %s290 = smul.addr %s289, 2
        %s291 = smul.addr %s290, 8
        %s292 = scalar_lea.vmem %s1, %s291
        %p293 = pneg %p69
        %p294 = pneg %p66
        %p295 = pneg %p90
        %p296 = pneg %p87
        %p297 = pneg %p111
        %p298 = pneg %p108
        %p299 = pneg %p132
        %p300 = pneg %p129
        %p301 = pneg %p153
        %p302 = pneg %p150
        %p303 = pneg %p174
        %p304 = pneg %p171
        %p305 = pneg %p195
        %p306 = pneg %p192
        %p307 = pneg %p221
        %p308 = pneg %p218
        %s309 = sand.u32 %s208, 1
        %s310 = scalar_lea.sflag [#allocation3], %s309
        %s311 = sand.u32 %s208, 1
        %s312 = smul.addr %s311, 16
        %s313 = scalar_lea.vmem [#allocation2], %s312
        %p314 = scmp.lt.s32.totalorder %s22, 1
        %s315 = scalar_select %p314, %s22, 1
        %s316 = smul.addr %s315, 2
        %s317 = smul.addr %s316, 8
        %s318 = scalar_lea.vmem %s0, %s317
        %p319 = scmp.lt.s32.totalorder %s22, 1
        %s320 = scalar_select %p319, %s22, 1
        %s321 = smul.addr %s320, 2
        %s322 = smul.addr %s321, 8
        %s323 = scalar_lea.vmem %s1, %s322
        %v325 = vld [vmem:[%s318] sm:$0xff]
        %v326 = vld [vmem:[%s318 + $0x8] sm:$0xff]
        %v327 = vld [vmem:[%s323] sm:$0xff]
        %v328 = vld [vmem:[%s323 + $0x8] sm:$0xff]
        %v329 = vlaneseq
        %v330 = vshrl.u32 %v329, 7
        %v331 = vadd.s32 %v330, 8
        %vm332 = vcmp.gt.s32.totalorder %v330, 0
        %vm333 = vcmp.gt.s32.totalorder %v331, 0
        %v334 = vsel %vm332, 1, 0
        %v335 = vsel %vm333, 1, 0
        %v336 = vcvt.s32.f32 %v334
        %v337 = vcvt.s32.f32 %v335
        %vm338 = vcmp.lt.s32.totalorder %v330, 15
        %vm339 = vcmp.lt.s32.totalorder %v331, 15
        %v340 = vsel %vm338, 1, 0
        %v341 = vsel %vm339, 1, 0
        %v342 = vcvt.s32.f32 %v340
        %v343 = vcvt.s32.f32 %v341
        %v344 = vrot.slane %v325, 7
        %v345 = vrot.slane %v326, 7
        %vm346 = vcmp.lt.s32.totalorder %v330, 1
        %v347 = vsel %vm346, %v344, %v345
        %v348 = vsel %vm346, %v345, %v344
        %v349 = vmul.f32 %v348, %v336
        %v350 = vmul.f32 %v347, %v337
        %v351 = vrot.slane %v325, 1
        %v352 = vrot.slane %v326, 1
        %vm353 = vcmp.lt.s32.totalorder %v330, 7
        %v354 = vsel %vm353, %v351, %v352
        %v355 = vsel %vm353, %v352, %v351
        %v356 = vmul.f32 %v354, %v342
        %v357 = vmul.f32 %v355, %v343
        %360 = vrot.lane.b32.xlu0 %v325, 32
        %v361 = vpop.permute.xlu0 %360
        %362 = vrot.lane.b32.xlu0 %v326, 32
        %v363 = vpop.permute.xlu0 %362
        %368 = vrot.lane.b32.xlu0 %v356, 64
        %v369 = vpop.permute.xlu0 %368
        %370 = vrot.lane.b32.xlu0 %v357, 64
        %v371 = vpop.permute.xlu0 %370
        %vm374 = vcmask 261120
        %v375 = vsel %vm374, %v349, %v361
        %v376 = vsel %vm374, %v350, %v363
        %vm377 = vcmask 523264
        %v378 = vsel %vm377, %v375, %v369
        %v379 = vsel %vm377, %v376, %v371
        %v380 = vpack.c.bf16 %v379, %v378
        %v381 = vld [vmem:[%s2] sm:$0xf]
        %v382 = vld [vmem:[%s2 + $0x4] sm:$0xf]
        %v383 = vld [vmem:[%s2 + $0x8] sm:$0xf]
        %v384 = vld [vmem:[%s2 + $0xc] sm:$0xf]
        %v385 = vld [vmem:[%s2 + $0x10] sm:$0xf]
        %v386 = vld [vmem:[%s2 + $0x14] sm:$0xf]
        %v387 = vld [vmem:[%s2 + $0x18] sm:$0xf]
        %v388 = vld [vmem:[%s2 + $0x1c] sm:$0xf]
        %v389 = vld [vmem:[%s2 + $0x20] sm:$0xf]
        %v390 = vld [vmem:[%s2 + $0x24] sm:$0xf]
        %v391 = vld [vmem:[%s2 + $0x28] sm:$0xf]
        %v392 = vld [vmem:[%s2 + $0x2c] sm:$0xf]
        %v393 = vld [vmem:[%s3] sm:$0x1]
        %v395 = vlaneseq
        %v396 = vshrl.u32 %v395, 7
        %v397 = vsub.s32 0, %v396
        %v398 = vrot.slane %v393, %v397
        %v412 = vunpack.c.l.b16 %v381
        %v413 = vunpack.c.l.b16 %v382
        %v414 = vunpack.c.l.b16 %v383
        %v415 = vunpack.c.l.b16 %v384
        %v416 = vunpack.c.l.b16 %v385
        %v417 = vunpack.c.l.b16 %v386
        %v418 = vunpack.c.l.b16 %v387
        %v419 = vunpack.c.l.b16 %v388
        %v420 = vunpack.c.l.b16 %v389
        %v421 = vunpack.c.l.b16 %v390
        %v422 = vunpack.c.l.b16 %v391
        %v423 = vunpack.c.l.b16 %v392
        %v424 = vpack.c.b16 %v413, %v412
        %v425 = vpack.c.b16 %v415, %v414
        %v426 = vpack.c.b16 %v417, %v416
        %v427 = vpack.c.b16 %v419, %v418
        %v428 = vpack.c.b16 %v421, %v420
        %v429 = vpack.c.b16 %v423, %v422
        %vm436 = vcmask 785408
        %v438 = vsel %vm436, %v380, 0
        %440 = vmatprep.subr.bf16.mxu0 0
        %441 = vmatpush1.bf16.msra.mxu0 %v424
        %442 = vmatprep.subr.bf16.mxu0 0
        %443 = vmatpush1.bf16.msra.mxu0 %v425
        %444 = vmatprep.subr.bf16.mxu0 0
        %445 = vmatpush1.bf16.msra.mxu0 %v426
        %446 = vmatprep.subr.bf16.mxu0 0
        %447 = vmatpush1.bf16.msra.mxu0 %v427
        %448 = vmatprep.subr.bf16.mxu0 0
        %449 = vmatpush1.bf16.msra.mxu0 %v428
        %450 = vmatprep.subr.bf16.mxu0 0
        %451 = vmatpush1.bf16.msra.mxu0 %v429
        %452 = vmatprep.subr.bf16.mxu0 0
        %453 = vmatpush1.bf16.msra.mxu0 0
        %454 = vmatprep.subr.bf16.mxu0 0
        %455 = vmatpush1.bf16.msra.mxu0 0
        %456 = vmatprep.subr.bf16.mxu0 0
        %457 = vmatpush1.bf16.msra.mxu0 0
        %458 = vmatprep.subr.bf16.mxu0 0
        %459 = vmatpush1.bf16.msra.mxu0 0
        %460 = vmatprep.subr.bf16.mxu0 0
        %461 = vmatpush1.bf16.msra.mxu0 0
        %462 = vmatprep.subr.bf16.mxu0 0
        %463 = vmatpush1.bf16.msra.mxu0 0
        %464 = vmatprep.subr.bf16.mxu0 0
        %465 = vmatpush1.bf16.msra.mxu0 0
        %466 = vmatprep.subr.bf16.mxu0 0
        %467 = vmatpush1.bf16.msra.mxu0 0
        %468 = vmatprep.subr.bf16.mxu0 0
        %469 = vmatpush1.bf16.msra.mxu0 0
        %470 = vmatprep.subr.bf16.mxu0 0
        %471 = vmatpush1.bf16.msra.mxu0 0
        %472 = vmatprep.mubr.bf16.mxu0 0
        %473 = vmatmul.mubr.bf16.gmra.mrb[0].mxu0 %v438
        %v474 = vpop.f32.mrb[0].mxu0
        %v475 = vadd.f32 %v398, %v474
        %v476 = vpop.f32.mrb[0].mxu0
        %v477 = vpop.f32.mrb[0].mxu0
        %v478 = vadd.f32 %v398, %v477
        %v479 = vpop.f32.mrb[0].mxu0
        %480 = vdwg.mxu0
        %482 = vset.pattern.permute.xlu0 0
        %483 = vperm.xlu0 %482, %v327
        %v484 = vpop.permute.xlu0 %483
        %487 = vset.pattern.permute.xlu0 0
        %488 = vperm.xlu0 %487, %v328
        %v489 = vpop.permute.xlu0 %488
        %v491 = vmul.f32 %v475, %v484
        %v492 = vmul.f32 %v478, %v489
        %v493 = vmax.f32 %v491, 0.0
        %v494 = vmax.f32 %v492, 0.0
        %v495 = vrot.slane %v493, 7
        %v496 = vrot.slane %v494, 7
        %v497 = vsel %vm346, %v495, %v496
        %v498 = vsel %vm346, %v496, %v495
        %v499 = vmul.f32 %v498, %v336
        %v500 = vmul.f32 %v497, %v337
        %v501 = vrot.slane %v493, 1
        %v502 = vrot.slane %v494, 1
        %v503 = vsel %vm353, %v501, %v502
        %v504 = vsel %vm353, %v502, %v501
        %v505 = vmul.f32 %v503, %v342
        %v506 = vmul.f32 %v504, %v343
        %509 = vrot.lane.b32.xlu0 %v493, 32
        %v510 = vpop.permute.xlu0 %509
        %511 = vrot.lane.b32.xlu0 %v494, 32
        %v512 = vpop.permute.xlu0 %511
        %517 = vrot.lane.b32.xlu0 %v505, 64
        %v518 = vpop.permute.xlu0 %517
        %519 = vrot.lane.b32.xlu0 %v506, 64
        %v520 = vpop.permute.xlu0 %519
        %v523 = vsel %vm374, %v499, %v510
        %v524 = vsel %vm374, %v500, %v512
        %v525 = vsel %vm377, %v523, %v518
        %v526 = vsel %vm377, %v524, %v520
        %v527 = vpack.c.bf16 %v526, %v525
        %v528 = vld [vmem:[%s4] sm:$0xf]
        %v529 = vld [vmem:[%s4 + $0x4] sm:$0xf]
        %v530 = vld [vmem:[%s4 + $0x8] sm:$0xf]
        %v531 = vld [vmem:[%s4 + $0xc] sm:$0xf]
        %v532 = vld [vmem:[%s4 + $0x10] sm:$0xf]
        %v533 = vld [vmem:[%s4 + $0x14] sm:$0xf]
        %v534 = vld [vmem:[%s4 + $0x18] sm:$0xf]
        %v535 = vld [vmem:[%s4 + $0x1c] sm:$0xf]
        %v536 = vld [vmem:[%s4 + $0x20] sm:$0xf]
        %v537 = vld [vmem:[%s4 + $0x24] sm:$0xf]
        %v538 = vld [vmem:[%s4 + $0x28] sm:$0xf]
        %v539 = vld [vmem:[%s4 + $0x2c] sm:$0xf]
        %v540 = vld [vmem:[%s5] sm:$0x1]
        %v542 = vlaneseq
        %v543 = vshrl.u32 %v542, 7
        %v544 = vsub.s32 0, %v543
        %v545 = vrot.slane %v540, %v544
        %v559 = vunpack.c.l.b16 %v528
        %v560 = vunpack.c.l.b16 %v529
        %v561 = vunpack.c.l.b16 %v530
        %v562 = vunpack.c.l.b16 %v531
        %v563 = vunpack.c.l.b16 %v532
        %v564 = vunpack.c.l.b16 %v533
        %v565 = vunpack.c.l.b16 %v534
        %v566 = vunpack.c.l.b16 %v535
        %v567 = vunpack.c.l.b16 %v536
        %v568 = vunpack.c.l.b16 %v537
        %v569 = vunpack.c.l.b16 %v538
        %v570 = vunpack.c.l.b16 %v539
        %v571 = vpack.c.b16 %v560, %v559
        %v572 = vpack.c.b16 %v562, %v561
        %v573 = vpack.c.b16 %v564, %v563
        %v574 = vpack.c.b16 %v566, %v565
        %v575 = vpack.c.b16 %v568, %v567
        %v576 = vpack.c.b16 %v570, %v569
        %v584 = vsel %vm436, %v527, 0
        %586 = vmatprep.subr.bf16.mxu0 0
        %587 = vmatpush1.bf16.msra.mxu0 %v571
        %588 = vmatprep.subr.bf16.mxu0 0
        %589 = vmatpush1.bf16.msra.mxu0 %v572
        %590 = vmatprep.subr.bf16.mxu0 0
        %591 = vmatpush1.bf16.msra.mxu0 %v573
        %592 = vmatprep.subr.bf16.mxu0 0
        %593 = vmatpush1.bf16.msra.mxu0 %v574
        %594 = vmatprep.subr.bf16.mxu0 0
        %595 = vmatpush1.bf16.msra.mxu0 %v575
        %596 = vmatprep.subr.bf16.mxu0 0
        %597 = vmatpush1.bf16.msra.mxu0 %v576
        %598 = vmatprep.subr.bf16.mxu0 0
        %599 = vmatpush1.bf16.msra.mxu0 0
        %600 = vmatprep.subr.bf16.mxu0 0
        %601 = vmatpush1.bf16.msra.mxu0 0
        %602 = vmatprep.subr.bf16.mxu0 0
        %603 = vmatpush1.bf16.msra.mxu0 0
        %604 = vmatprep.subr.bf16.mxu0 0
        %605 = vmatpush1.bf16.msra.mxu0 0
        %606 = vmatprep.subr.bf16.mxu0 0
        %607 = vmatpush1.bf16.msra.mxu0 0
        %608 = vmatprep.subr.bf16.mxu0 0
        %609 = vmatpush1.bf16.msra.mxu0 0
        %610 = vmatprep.subr.bf16.mxu0 0
        %611 = vmatpush1.bf16.msra.mxu0 0
        %612 = vmatprep.subr.bf16.mxu0 0
        %613 = vmatpush1.bf16.msra.mxu0 0
        %614 = vmatprep.subr.bf16.mxu0 0
        %615 = vmatpush1.bf16.msra.mxu0 0
        %616 = vmatprep.subr.bf16.mxu0 0
        %617 = vmatpush1.bf16.msra.mxu0 0
        %618 = vmatprep.mubr.bf16.mxu0 0
        %619 = vmatmul.mubr.bf16.gmra.mrb[0].mxu0 %v584
        %v620 = vpop.f32.mrb[0].mxu0
        %v621 = vadd.f32 %v545, %v620
        %v622 = vpop.f32.mrb[0].mxu0
        %v623 = vpop.f32.mrb[0].mxu0
        %v624 = vadd.f32 %v545, %v623
        %v625 = vpop.f32.mrb[0].mxu0
        %626 = vdwg.mxu0
        %v627 = vmul.f32 %v621, %v484
        %v628 = vmul.f32 %v624, %v489
        %v629 = vmax.f32 %v627, 0.0
        %v630 = vmax.f32 %v628, 0.0
        %v631 = vrot.slane %v629, 7
        %v632 = vrot.slane %v630, 7
        %v633 = vsel %vm346, %v631, %v632
        %v634 = vsel %vm346, %v632, %v631
        %v635 = vmul.f32 %v634, %v336
        %v636 = vmul.f32 %v633, %v337
        %v637 = vrot.slane %v629, 1
        %v638 = vrot.slane %v630, 1
        %v639 = vsel %vm353, %v637, %v638
        %v640 = vsel %vm353, %v638, %v637
        %v641 = vmul.f32 %v639, %v342
        %v642 = vmul.f32 %v640, %v343
        %645 = vrot.lane.b32.xlu0 %v629, 32
        %v646 = vpop.permute.xlu0 %645
        %647 = vrot.lane.b32.xlu0 %v630, 32
        %v648 = vpop.permute.xlu0 %647
        %653 = vrot.lane.b32.xlu0 %v641, 64
        %v654 = vpop.permute.xlu0 %653
        %655 = vrot.lane.b32.xlu0 %v642, 64
        %v656 = vpop.permute.xlu0 %655
        %v659 = vsel %vm374, %v635, %v646
        %v660 = vsel %vm374, %v636, %v648
        %v661 = vsel %vm377, %v659, %v654
        %v662 = vsel %vm377, %v660, %v656
        %v663 = vpack.c.bf16 %v662, %v661
        %v664 = vld [vmem:[%s6] sm:$0xf]
        %v665 = vld [vmem:[%s6 + $0x4] sm:$0xf]
        %v666 = vld [vmem:[%s6 + $0x8] sm:$0xf]
        %v667 = vld [vmem:[%s6 + $0xc] sm:$0xf]
        %v668 = vld [vmem:[%s6 + $0x10] sm:$0xf]
        %v669 = vld [vmem:[%s6 + $0x14] sm:$0xf]
        %v670 = vld [vmem:[%s6 + $0x18] sm:$0xf]
        %v671 = vld [vmem:[%s6 + $0x1c] sm:$0xf]
        %v672 = vld [vmem:[%s6 + $0x20] sm:$0xf]
        %v673 = vld [vmem:[%s6 + $0x24] sm:$0xf]
        %v674 = vld [vmem:[%s6 + $0x28] sm:$0xf]
        %v675 = vld [vmem:[%s6 + $0x2c] sm:$0xf]
        %v676 = vld [vmem:[%s7] sm:$0x1]
        %v678 = vlaneseq
        %v679 = vshrl.u32 %v678, 7
        %v680 = vsub.s32 0, %v679
        %v681 = vrot.slane %v676, %v680
        %v695 = vunpack.c.l.b16 %v664
        %v696 = vunpack.c.l.b16 %v665
        %v697 = vunpack.c.l.b16 %v666
        %v698 = vunpack.c.l.b16 %v667
        %v699 = vunpack.c.l.b16 %v668
        %v700 = vunpack.c.l.b16 %v669
        %v701 = vunpack.c.l.b16 %v670
        %v702 = vunpack.c.l.b16 %v671
        %v703 = vunpack.c.l.b16 %v672
        %v704 = vunpack.c.l.b16 %v673
        %v705 = vunpack.c.l.b16 %v674
        %v706 = vunpack.c.l.b16 %v675
        %v707 = vpack.c.b16 %v696, %v695
        %v708 = vpack.c.b16 %v698, %v697
        %v709 = vpack.c.b16 %v700, %v699
        %v710 = vpack.c.b16 %v702, %v701
        %v711 = vpack.c.b16 %v704, %v703
        %v712 = vpack.c.b16 %v706, %v705
        %v720 = vsel %vm436, %v663, 0
        %722 = vmatprep.subr.bf16.mxu0 0
        %723 = vmatpush1.bf16.msra.mxu0 %v707
        %724 = vmatprep.subr.bf16.mxu0 0
        %725 = vmatpush1.bf16.msra.mxu0 %v708
        %726 = vmatprep.subr.bf16.mxu0 0
        %727 = vmatpush1.bf16.msra.mxu0 %v709
        %728 = vmatprep.subr.bf16.mxu0 0
        %729 = vmatpush1.bf16.msra.mxu0 %v710
        %730 = vmatprep.subr.bf16.mxu0 0
        %731 = vmatpush1.bf16.msra.mxu0 %v711
        %732 = vmatprep.subr.bf16.mxu0 0
        %733 = vmatpush1.bf16.msra.mxu0 %v712
        %734 = vmatprep.subr.bf16.mxu0 0
        %735 = vmatpush1.bf16.msra.mxu0 0
        %736 = vmatprep.subr.bf16.mxu0 0
        %737 = vmatpush1.bf16.msra.mxu0 0
        %738 = vmatprep.subr.bf16.mxu0 0
        %739 = vmatpush1.bf16.msra.mxu0 0
        %740 = vmatprep.subr.bf16.mxu0 0
        %741 = vmatpush1.bf16.msra.mxu0 0
        %742 = vmatprep.subr.bf16.mxu0 0
        %743 = vmatpush1.bf16.msra.mxu0 0
        %744 = vmatprep.subr.bf16.mxu0 0
        %745 = vmatpush1.bf16.msra.mxu0 0
        %746 = vmatprep.subr.bf16.mxu0 0
        %747 = vmatpush1.bf16.msra.mxu0 0
        %748 = vmatprep.subr.bf16.mxu0 0
        %749 = vmatpush1.bf16.msra.mxu0 0
        %750 = vmatprep.subr.bf16.mxu0 0
        %751 = vmatpush1.bf16.msra.mxu0 0
        %752 = vmatprep.subr.bf16.mxu0 0
        %753 = vmatpush1.bf16.msra.mxu0 0
        %754 = vmatprep.mubr.bf16.mxu0 0
        %755 = vmatmul.mubr.bf16.gmra.mrb[0].mxu0 %v720
        %v756 = vpop.f32.mrb[0].mxu0
        %v757 = vadd.f32 %v681, %v756
        %v758 = vpop.f32.mrb[0].mxu0
        %v759 = vpop.f32.mrb[0].mxu0
        %v760 = vadd.f32 %v681, %v759
        %v761 = vpop.f32.mrb[0].mxu0
        %762 = vdwg.mxu0
        %v763 = vmul.f32 %v757, %v484
        %v764 = vmul.f32 %v760, %v489
        %vm765 = vcmask 359424
        %766 = vst.msk [vmem:[%s313] sm:$0xff] %vm765, %v763
        %767 = vst.msk [vmem:[%s313 + $0x8] sm:$0xff] %vm765, %v764
        %s768 = sand.u32 %s208, 1
        %s769 = scalar_lea.sflag [#allocation3], %s768
        %s770 = sand.u32 %s208, 1
        %s771 = smul.addr %s770, 16
        %s772 = scalar_lea.vmem [#allocation2], %s771
        // Predicated region
        $region53: #{tpu_custom_call.1} parent=51 // pred_check
          %p773 = pneg %p218
        $region54: #{tpu_custom_call.1} parent=51 // pred_check_branch
          %775 = sbr.rel (%p773) target = $region56
        $region55: #{tpu_custom_call.1} parent=51 // pred_region
          %s777 = ssub.s32 256, 256
          %778 = vsyncadd %s769, %s777
          %s779 = smul.addr %s22, 2
          %s780 = smul.addr %s779, 128
          %s781 = scalar_lea.hbm %s8, %s780
          %s782 = sshll.u32 %s772, 4
          %s783 = int_to_ptr.vmem [resolvable:$true] %s782
          %788 = dma.vmem_to_hbm [thread:$0]  %s783, 256, %s781, %s769, 128, 128, 8
        $region56: #{tpu_custom_call.1} parent=51 // pred_fallthru
          _
      $region52: #{tpu_custom_call.1} parent=5 // pred_fallthru
        _
      %p789 = scmp.le.s32.totalorder 2, %s17
      // Predicated region
      $region57: #{tpu_custom_call.1} parent=5 // pred_check
        %p790 = pneg %p789
      $region58: #{tpu_custom_call.1} parent=5 // pred_check_branch
        %792 = sbr.rel (%p790) target = $region60
      $region59: #{tpu_custom_call.1} parent=5 // pred_region
        %s793 = ssub.s32 %s17, 2
        // Predicated region
        $region61: #{tpu_custom_call.1} parent=59 // pred_check
          %p794 = pneg %p224
        $region62: #{tpu_custom_call.1} parent=59 // pred_check_branch
          %796 = sbr.rel (%p794) target = $region64
        $region63: #{tpu_custom_call.1} parent=59 // pred_region
          %s797 = sand.u32 %s209, 1
          %s798 = scalar_lea.sflag [#allocation3], %s797
          %s799 = sand.u32 %s209, 1
          %s800 = smul.addr %s799, 16
          %s801 = scalar_lea.vmem [#allocation2], %s800
          %802 = dma.done %s798, 256
        $region64: #{tpu_custom_call.1} parent=59 // pred_fallthru
          _
      $region60: #{tpu_custom_call.1} parent=5 // pred_fallthru
        _
    $region6: #{tpu_custom_call.1} parent=1 // loop_footer
      %s21 = sadd.s32 1, %s17
    $region7: #{tpu_custom_call.1} parent=1 // loop_footer_branch
      %16 = sbr.rel target = $region3
    $region8: #{tpu_custom_call.1} parent=1 // loop_exit
      _
    %803 = vsyncpa [#allocation3], 1
    %s804 = scalar_lea.sflag [#allocation3], 1
    %805 = vsyncpa %s804, 1

</llo_original>
